<compile_context>
chip_gen: v7x
topology: tpu7x:2x2x1
jax: 0.10.0
libtpu: 0.0.40
codegen_flags: <defaults>
</compile_context>

<pallas_src>
import functools
import math

import jax
import jax.numpy as jnp
from jax.experimental import pallas as pl
from jax.experimental.pallas import tpu as pltpu

_LANE = 128   # lane (last-dim) alignment for adj / outputs


def _round_up(v, m):
    return ((v + m - 1) // m) * m


def _pad_to(a, shape):
    pads = tuple((0, t - s) for s, t in zip(a.shape, shape))
    if all(p == (0, 0) for p in pads):
        return a
    return jnp.pad(a, pads)


@functools.lru_cache(maxsize=None)
def _hw_vmem_bytes():
    """Physical VMEM per TensorCore; conservative fallback if unavailable."""
    try:
        info = pltpu.get_tpu_info()
        cap = int(getattr(info, "vmem_capacity_bytes", 0) or 0)
        if cap > 0:
            return cap
    except Exception:
        pass
    return 64 << 20   # v7x per-TC size = most restrictive current generation


def _vmem_limit(need_bytes):
    """need + headroom, never requesting all of physical VMEM (leave room for
    compiler-internal scratch; matters most on v7x's 64 MiB)."""
    cap = min(_hw_vmem_bytes() - (8 << 20), 100 << 20)
    return int(max(min(need_bytes + (4 << 20), cap), 16 << 20))


def _fused_vmem_budget():
    cap = _hw_vmem_bytes()
    if cap >= (96 << 20):
        # v5e / v6e: 128 MiB VMEM, single TensorCore per chip -> the fused
        # path (adj streamed from HBM once instead of twice) wins broadly.
        return int(0.45 * cap)
    # v7x: 64 MiB per TC and the tiled path's "parallel" row axis shards
    # across both TCs -> keep the fused (grid=(1,), single-core) threshold low.
    return int(0.30 * cap)


def _fused_vmem_need(n_p, f_in, fh_p, fo_p, compute_dtype):
    isz = jnp.dtype(compute_dtype).itemsize
    in_bytes = (n_p * f_in * 4          # x (f32)
                + f_in * fh_p * 4       # W1 (f32)
                + fh_p * 4              # b1
                + fh_p * fo_p * 4       # W2
                + fo_p * 4              # b2
                + n_p * n_p * isz)      # adj (compute_dtype)
    out_bytes = n_p * fo_p * 4
    # in-kernel temporaries: s1 (f32) + its cast, h (f32), s2 (f32) + cast
    tmp = n_p * fh_p * (8 + isz) + n_p * fo_p * (4 + isz)
    # Pallas double-buffers every input/output block, even for grid=(1,).
    return 2 * (in_bytes + out_bytes) + tmp


# --------------------------------------------------------------------------
# Fused 2-layer kernel (small/medium graphs): one pallas_call, adj read once,
# hidden activation never leaves VMEM.
# --------------------------------------------------------------------------
def _gcn2_fused_kernel(x_ref, w1_ref, b1_ref, w2_ref, b2_ref, adj_ref, out_ref,
                       *, compute_dtype):
    adj = adj_ref[...]                                     # compute_dtype
    # Layer 1: h = adj @ (x @ W1) + b1   (x@W in f32, adj matmul f32-accum).
    s1 = jnp.dot(x_ref[...], w1_ref[...], preferred_element_type=jnp.float32)
    h = jnp.dot(adj, s1.astype(compute_dtype),
                preferred_element_type=jnp.float32) + b1_ref[...]
    # Layer 2: out = adj @ (h @ W2) + b2  (h stays VMEM-resident, f32).
    s2 = jnp.dot(h, w2_ref[...], preferred_element_type=jnp.float32)
    out_ref[...] = (
        jnp.dot(adj, s2.astype(compute_dtype), preferred_element_type=jnp.float32)
        + b2_ref[...]
    ).astype(out_ref.dtype)


def _gcn2_fused(x, adj, w1, b1, w2, b2, *, compute_dtype):
    n, f_in = x.shape
    f_hid = w1.shape[1]
    f_out = w2.shape[1]

    n_p = _round_up(n, _LANE)
    fh_p = _round_up(f_hid, _LANE)
    fo_p = _round_up(f_out, _LANE)

    x_p = _pad_to(x, (n_p, f_in)).astype(jnp.float32)        # f_in left unpadded
    adj_p = _pad_to(adj, (n_p, n_p)).astype(compute_dtype)   # only adj is cast
    w1_p = _pad_to(w1, (f_in, fh_p)).astype(jnp.float32)
    w2_p = _pad_to(w2, (fh_p, fo_p)).astype(jnp.float32)
    b1_p = _pad_to(b1.reshape(1, -1), (1, fh_p)).astype(jnp.float32)
    b2_p = _pad_to(b2.reshape(1, -1), (1, fo_p)).astype(jnp.float32)

    need = _fused_vmem_need(n_p, f_in, fh_p, fo_p, compute_dtype)

    out_p = pl.pallas_call(
        functools.partial(_gcn2_fused_kernel, compute_dtype=compute_dtype),
        out_shape=jax.ShapeDtypeStruct((n_p, fo_p), jnp.float32),
        grid_spec=pltpu.PrefetchScalarGridSpec(
            num_scalar_prefetch=0,
            grid=(1,),
            in_specs=[
                pl.BlockSpec((n_p, f_in), lambda i: (0, 0)),
                pl.BlockSpec((f_in, fh_p), lambda i: (0, 0)),
                pl.BlockSpec((1, fh_p), lambda i: (0, 0)),
                pl.BlockSpec((fh_p, fo_p), lambda i: (0, 0)),
                pl.BlockSpec((1, fo_p), lambda i: (0, 0)),
                pl.BlockSpec((n_p, n_p), lambda i: (0, 0)),
            ],
            out_specs=pl.BlockSpec((n_p, fo_p), lambda i: (0, 0)),
        ),
        compiler_params=pltpu.CompilerParams(
            dimension_semantics=("arbitrary",),
            vmem_limit_bytes=_vmem_limit(need),
        ),
    )(x_p, w1_p, b1_p, w2_p, b2_p, adj_p)
    return out_p[:n, :f_out]


# --------------------------------------------------------------------------
# Tiled per-layer path (large graphs):
#   kernel 1: support = x @ W   (computed once, stored as compute_dtype)
#   kernel 2: out = adj @ support + b, grid=(row tiles, reduction tiles),
#             accumulating directly into the resident f32 output block.
# --------------------------------------------------------------------------
def _support_kernel(x_ref, w_ref, out_ref):
    out_ref[...] = jnp.dot(x_ref[...], w_ref[...],
                           preferred_element_type=jnp.float32).astype(out_ref.dtype)


def _compute_support(x_p, w_p, *, out_dtype, ts):
    n_pad, f_x = x_p.shape
    fo_p = w_p.shape[1]
    need = 2 * (ts * f_x * 4 + f_x * fo_p * 4
                + ts * fo_p * jnp.dtype(out_dtype).itemsize)
    return pl.pallas_call(
        _support_kernel,
        out_shape=jax.ShapeDtypeStruct((n_pad, fo_p), out_dtype),
        grid_spec=pltpu.PrefetchScalarGridSpec(
            num_scalar_prefetch=0,
            grid=(n_pad // ts,),
            in_specs=[
                pl.BlockSpec((ts, f_x), lambda i: (i, 0)),     # f_x left unpadded
                pl.BlockSpec((f_x, fo_p), lambda i: (0, 0)),   # W VMEM-resident
            ],
            out_specs=pl.BlockSpec((ts, fo_p), lambda i: (i, 0)),
        ),
        compiler_params=pltpu.CompilerParams(
            dimension_semantics=("parallel",),
            vmem_limit_bytes=_vmem_limit(need),
        ),
    )(x_p, w_p)


def _adj_agg_kernel(support_ref, b_ref, adj_ref, out_ref):
    k = pl.program_id(1)

    @pl.when(k == 0)
    def _init():
        out_ref[...] = jnp.zeros_like(out_ref)

    # Output block index is (i, 0): constant along k -> VMEM-resident, so we
    # accumulate straight into the f32 output (no scratch accumulator).
    out_ref[...] += jnp.dot(adj_ref[...], support_ref[...],
                            preferred_element_type=jnp.float32)

    @pl.when(k == pl.num_programs(1) - 1)
    def _epilogue():
        out_ref[...] += b_ref[...]


def _gcn_layer_tiled(x_p, adj_p, w, b, *, compute_dtype, tm, tk):
    # x_p: (n_pad, f_x) f32 (possibly lane-padded activation from the previous
    # layer, padded columns are exactly zero); adj_p: (n_pad, n_pad) compute_dtype.
    n_pad, f_x = x_p.shape
    f_out = w.shape[1]
    fo_p = _round_up(f_out, _LANE)
    # Pad W rows up to the activation width (exact: extra x columns are zero)
    # and columns up to a lane multiple.
    w_p = _pad_to(w, (f_x, fo_p)).astype(jnp.float32)
    b_p = _pad_to(b.reshape(1, -1), (1, fo_p)).astype(jnp.float32)

    # support = x @ W, computed once (f32 accumulation), streamed as
    # compute_dtype (bf16 by default) into the adj aggregation.
    support = _compute_support(x_p, w_p, out_dtype=compute_dtype, ts=tk)

    grid = (n_pad // tm, n_pad // tk)
    isz = jnp.dtype(compute_dtype).itemsize
    need = 2 * (tk * fo_p * isz + fo_p * 4 + tm * tk * isz + tm * fo_p * 4)

    out_p = pl.pallas_call(
        _adj_agg_kernel,
        out_shape=jax.ShapeDtypeStruct((n_pad, fo_p), jnp.float32),
        grid_spec=pltpu.PrefetchScalarGridSpec(
            num_scalar_prefetch=0,
            grid=grid,
            in_specs=[
                pl.BlockSpec((tk, fo_p), lambda i, k: (k, 0)),   # support k-tile
                pl.BlockSpec((1, fo_p), lambda i, k: (0, 0)),    # bias (epilogue)
                # TODO(synk): on v5e, pipeline_mode=pl.Buffered(3) on the adj
                # spec may help if the profile shows exposed DMA; fp8 adj on
                # v7x is a further option once accuracy is validated.
                pl.BlockSpec((tm, tk), lambda i, k: (i, k)),     # adj tile (streamed)
            ],
            out_specs=pl.BlockSpec((tm, fo_p), lambda i, k: (i, 0)),
        ),
        compiler_params=pltpu.CompilerParams(
            dimension_semantics=("parallel", "arbitrary"),
            vmem_limit_bytes=_vmem_limit(need),
        ),
    )(support, b_p, adj_p)
    return out_p   # padded (n_pad, fo_p) f32; caller slices once at the end


# --------------------------------------------------------------------------
# GCN forward (matches the PyTorch module: chain layers, no activation).
# --------------------------------------------------------------------------
@functools.partial(jax.jit,
                   static_argnames=("compute_dtype", "force_tiled", "tm", "tk"))
def gcn_forward(x, adj, params, *, compute_dtype=jnp.bfloat16,
                force_tiled=False, tm=512, tk=512):
    # TODO(synk): self.dropout is declared in the PyTorch module but never
    # applied in its forward(), so it is intentionally not implemented.
    n = x.shape[0]

    if len(params) == 2 and not force_tiled:
        (w1, b1), (w2, b2) = params
        n_p = _round_up(n, _LANE)
        fh_p = _round_up(w1.shape[1], _LANE)
        fo_p = _round_up(w2.shape[1], _LANE)
        need = _fused_vmem_need(n_p, w1.shape[0], fh_p, fo_p, compute_dtype)
        if need <= _fused_vmem_budget():
            return _gcn2_fused(x, adj, w1, b1, w2, b2, compute_dtype=compute_dtype)

    # Tiled per-layer path: pad/cast adj once, keep activations padded between
    # layers, slice only at the very end.
    n_lane = _round_up(n, _LANE)
    tm = min(tm, n_lane)
    tk = min(tk, n_lane)
    n_pad = _round_up(n, math.lcm(tm, tk))
    x_p = _pad_to(x, (n_pad, x.shape[1])).astype(jnp.float32)
    adj_p = _pad_to(adj, (n_pad, n_pad)).astype(compute_dtype)

    out = x_p
    for w, b in params:
        out = _gcn_layer_tiled(out, adj_p, w, b, compute_dtype=compute_dtype,
                               tm=tm, tk=tk)
    return out[:n, :params[-1][0].shape[1]]


def init_gcn_params(key, network):
    """uniform(-stdv, stdv), stdv = 1/sqrt(out_features) — matches
    GraphConvolution.reset_parameters."""
    params = []
    for idx in range(len(network) - 1):
        f_in, f_out = network[idx], network[idx + 1]
        key, kw, kb = jax.random.split(key, 3)
        stdv = 1.0 / jnp.sqrt(jnp.float32(f_out))
        w = jax.random.uniform(kw, (f_in, f_out), jnp.float32, -stdv, stdv)
        b = jax.random.uniform(kb, (f_out,), jnp.float32, -stdv, stdv)
        params.append((w, b))
    return params


if __name__ == "__main__":
    key = jax.random.PRNGKey(0)

    def make_graph(k, n_nodes, f_in):
        kx, ka = jax.random.split(k)
        x = jax.random.normal(kx, (n_nodes, f_in), jnp.float32)
        a_raw = (jax.random.uniform(ka, (n_nodes, n_nodes)) > 0.7).astype(jnp.float32)
        a_sym = jnp.maximum(a_raw, a_raw.T) + jnp.eye(n_nodes, dtype=jnp.float32)
        adj = a_sym / jnp.sum(a_sym, axis=1, keepdims=True)
        return x, adj

    def ref_forward(x, adj, params):
        out = x
        for w, b in params:
            out = adj @ (out @ w) + b
        return out

    network = (16, 32, 8)
    key, kp, kg1, kg2 = jax.random.split(key, 4)
    params = tuple(init_gcn_params(kp, network))

    # 1) Small graph, f32 -> fused 2-layer kernel (single pallas_call), tight check.
    n_small = 32
    x_s, adj_s = make_graph(kg1, n_small, network[0])
    ref_s = ref_forward(x_s, adj_s, params)
    out_s32 = gcn_forward(x_s, adj_s, params, compute_dtype=jnp.float32)
    jax.block_until_ready(out_s32)
    assert out_s32.shape == (n_small, network[-1])
    assert jnp.allclose(out_s32, ref_s, atol=1e-4, rtol=1e-4)

    # 2) Small graph, default bf16-adj fused path (loose check vs f32 ref).
    out_sbf = gcn_forward(x_s, adj_s, params)
    jax.block_until_ready(out_sbf)
    assert jnp.allclose(out_sbf, ref_s, atol=2e-2, rtol=2e-2)

    # 3) Larger, non-128-aligned graph -> tiled path with small tiles so the
    #    grid has several row AND reduction steps (exercises the resident-
    #    output accumulation and bias epilogue); f32 for a tight check.
    n_big = 320
    x_b, adj_b = make_graph(kg2, n_big, network[0])
    ref_b = ref_forward(x_b, adj_b, params)
    out_b32 = gcn_forward(x_b, adj_b, params, compute_dtype=jnp.float32,
                          force_tiled=True, tm=128, tk=128)
    jax.block_until_ready(out_b32)
    assert out_b32.shape == (n_big, network[-1])
    assert jnp.allclose(out_b32, ref_b, atol=1e-3, rtol=1e-3)

    # 4) Default config (bf16 adj/support stream, 512 tiles clamped to the
    #    padded graph size) on the tiled path.
    out_bbf = gcn_forward(x_b, adj_b, params, force_tiled=True)
    jax.block_until_ready(out_bbf)
    assert jnp.allclose(out_bbf, ref_b, atol=2e-2, rtol=2e-2)

    print("KERNEL_OK")
</pallas_src>

<mosaic_0001>
module attributes {stable_mosaic.version = 11 : i64} {
  func.func @_gcn2_fused_kernel(%arg0: i32, %arg1: memref<128x16xf32, #tpu.memory_space<vmem>>, %arg2: memref<16x128xf32, #tpu.memory_space<vmem>>, %arg3: memref<1x128xf32, #tpu.memory_space<vmem>>, %arg4: memref<128x128xf32, #tpu.memory_space<vmem>>, %arg5: memref<1x128xf32, #tpu.memory_space<vmem>>, %arg6: memref<128x128xf32, #tpu.memory_space<vmem>>, %arg7: memref<128x128xf32, #tpu.memory_space<vmem>>) attributes {dimension_semantics = [#tpu.dimension_semantics<arbitrary>], iteration_bounds = array<i64: 1>, scalar_prefetch = 0 : i64, scratch_operands = 0 : i64, tpu.core_type = #tpu.core_type<tc>, window_params = [{pipeline_mode = #tpu.pipeline_mode<synchronous>, transform_indices = @transform_0, window_bounds = array<i64: 128, 16>}, {pipeline_mode = #tpu.pipeline_mode<synchronous>, transform_indices = @transform_1, window_bounds = array<i64: 16, 128>}, {pipeline_mode = #tpu.pipeline_mode<synchronous>, transform_indices = @transform_2, window_bounds = array<i64: 1, 128>}, {pipeline_mode = #tpu.pipeline_mode<synchronous>, transform_indices = @transform_3, window_bounds = array<i64: 128, 128>}, {pipeline_mode = #tpu.pipeline_mode<synchronous>, transform_indices = @transform_4, window_bounds = array<i64: 1, 128>}, {pipeline_mode = #tpu.pipeline_mode<synchronous>, transform_indices = @transform_5, window_bounds = array<i64: 128, 128>}, {pipeline_mode = #tpu.pipeline_mode<synchronous>, transform_indices = @transform_6, window_bounds = array<i64: 128, 128>}]} {
    %c0 = arith.constant 0 : index
    %c0_0 = arith.constant 0 : index
    %0 = vector.load %arg6[%c0, %c0_0] : memref<128x128xf32, #tpu.memory_space<vmem>>, vector<128x128xf32>
    %c0_1 = arith.constant 0 : index
    %c0_2 = arith.constant 0 : index
    %1 = vector.load %arg1[%c0_1, %c0_2] : memref<128x16xf32, #tpu.memory_space<vmem>>, vector<128x16xf32>
    %c0_3 = arith.constant 0 : index
    %c0_4 = arith.constant 0 : index
    %2 = vector.load %arg2[%c0_3, %c0_4] : memref<16x128xf32, #tpu.memory_space<vmem>>, vector<16x128xf32>
    %cst = arith.constant dense<0.000000e+00> : vector<128x128xf32>
    %3 = tpu.matmul %1, %2, %cst {dimension_numbers = #tpu.dot_dimension_numbers<[1], [0], [0], [1], [0, 0, 1, 1], [], []>} : vector<128x16xf32>, vector<16x128xf32>, vector<128x128xf32> -> vector<128x128xf32>
    %cst_5 = arith.constant dense<0.000000e+00> : vector<128x128xf32>
    %4 = tpu.matmul %0, %3, %cst_5 {dimension_numbers = #tpu.dot_dimension_numbers<[1], [0], [0], [1], [0, 0, 1, 1], [], []>} : vector<128x128xf32>, vector<128x128xf32>, vector<128x128xf32> -> vector<128x128xf32>
    %c0_6 = arith.constant 0 : index
    %c0_7 = arith.constant 0 : index
    %5 = vector.load %arg3[%c0_6, %c0_7] : memref<1x128xf32, #tpu.memory_space<vmem>>, vector<1x128xf32>
    %6 = vector.broadcast %5 : vector<1x128xf32> to vector<128x128xf32>
    %7 = arith.addf %4, %6 : vector<128x128xf32>
    %c0_8 = arith.constant 0 : index
    %c0_9 = arith.constant 0 : index
    %8 = vector.load %arg4[%c0_8, %c0_9] : memref<128x128xf32, #tpu.memory_space<vmem>>, vector<128x128xf32>
    %cst_10 = arith.constant dense<0.000000e+00> : vector<128x128xf32>
    %9 = tpu.matmul %7, %8, %cst_10 {dimension_numbers = #tpu.dot_dimension_numbers<[1], [0], [0], [1], [0, 0, 1, 1], [], []>} : vector<128x128xf32>, vector<128x128xf32>, vector<128x128xf32> -> vector<128x128xf32>
    %cst_11 = arith.constant dense<0.000000e+00> : vector<128x128xf32>
    %10 = tpu.matmul %0, %9, %cst_11 {dimension_numbers = #tpu.dot_dimension_numbers<[1], [0], [0], [1], [0, 0, 1, 1], [], []>} : vector<128x128xf32>, vector<128x128xf32>, vector<128x128xf32> -> vector<128x128xf32>
    %c0_12 = arith.constant 0 : index
    %c0_13 = arith.constant 0 : index
    %11 = vector.load %arg5[%c0_12, %c0_13] : memref<1x128xf32, #tpu.memory_space<vmem>>, vector<1x128xf32>
    %12 = vector.broadcast %11 : vector<1x128xf32> to vector<128x128xf32>
    %13 = arith.addf %10, %12 : vector<128x128xf32>
    %c0_14 = arith.constant 0 : index
    %c0_15 = arith.constant 0 : index
    %14 = vector.load %arg7[%c0_14, %c0_15] : memref<128x128xf32, #tpu.memory_space<vmem>>, vector<128x128xf32>
    tpu.vector_store %arg7[%c0_14, %c0_15], %13 {strides = array<i32>} : memref<128x128xf32, #tpu.memory_space<vmem>>, vector<128x128xf32>,
    return
  }
  func.func @transform_0(%arg0: i32) -> (i32, i32) {
    %c0_i32 = arith.constant 0 : i32
    %c0_i32_0 = arith.constant 0 : i32
    %c0_i32_1 = arith.constant 0 : i32
    return %c0_i32, %c0_i32_0 : i32, i32
  }
  func.func @transform_1(%arg0: i32) -> (i32, i32) {
    %c0_i32 = arith.constant 0 : i32
    %c0_i32_0 = arith.constant 0 : i32
    %c0_i32_1 = arith.constant 0 : i32
    return %c0_i32, %c0_i32_0 : i32, i32
  }
  func.func @transform_2(%arg0: i32) -> (i32, i32) {
    %c0_i32 = arith.constant 0 : i32
    %c0_i32_0 = arith.constant 0 : i32
    %c0_i32_1 = arith.constant 0 : i32
    return %c0_i32, %c0_i32_0 : i32, i32
  }
  func.func @transform_3(%arg0: i32) -> (i32, i32) {
    %c0_i32 = arith.constant 0 : i32
    %c0_i32_0 = arith.constant 0 : i32
    %c0_i32_1 = arith.constant 0 : i32
    return %c0_i32, %c0_i32_0 : i32, i32
  }
  func.func @transform_4(%arg0: i32) -> (i32, i32) {
    %c0_i32 = arith.constant 0 : i32
    %c0_i32_0 = arith.constant 0 : i32
    %c0_i32_1 = arith.constant 0 : i32
    return %c0_i32, %c0_i32_0 : i32, i32
  }
  func.func @transform_5(%arg0: i32) -> (i32, i32) {
    %c0_i32 = arith.constant 0 : i32
    %c0_i32_0 = arith.constant 0 : i32
    %c0_i32_1 = arith.constant 0 : i32
    return %c0_i32, %c0_i32_0 : i32, i32
  }
  func.func @transform_6(%arg0: i32) -> (i32, i32) {
    %c0_i32 = arith.constant 0 : i32
    %c0_i32_0 = arith.constant 0 : i32
    %c0_i32_1 = arith.constant 0 : i32
    return %c0_i32, %c0_i32_0 : i32, i32
  }
}

</mosaic_0001>

<llo_original>
// kernel: gcn_forward.1
$region0: #{gcn_forward.1}
  #allocation0 [shape = 'u32[]', space=smem, size = 0x4, offset = 0x4, fixed_abs, tag = 'smem constant byte address 0x4 - core index']
  #allocation1 [shape = 'u32[144,128]{1,0:T(1,128)}', space=vmem, size = 0x12000, scoped, tag = 'internal scratch']
  %s0 = inlined_call_operand.vmem [shape: f32[128,16], index: 0, kind: input, shape index: {}]
  %s1 = inlined_call_operand.vmem [shape: f32[16,128], index: 1, kind: input, shape index: {}]
  %s2 = inlined_call_operand.vmem [shape: f32[1,128], index: 2, kind: input, shape index: {}]
  %s3 = inlined_call_operand.vmem [shape: f32[128,128], index: 3, kind: input, shape index: {}]
  %s4 = inlined_call_operand.vmem [shape: f32[1,128], index: 4, kind: input, shape index: {}]
  %s5 = inlined_call_operand.vmem [shape: f32[128,128], index: 5, kind: input, shape index: {}]
  %s6 = inlined_call_operand.vmem [shape: f32[128,128], index: 6, kind: output, shape index: {}]
  %s7 = sld [smem:[#allocation0]]
  $region34: #{gcn_forward.1} parent=0
    _
  %s9 = ssub.s32 1, %s7
  %s10 = scalar_select 0, %s9, %s7
  // Predicated region
  $region2: #{gcn_forward.1} parent=0 // pred_check
    _
  $region3: #{gcn_forward.1} parent=0 // pred_check_branch
    %12 = sbr.rel (0) target = $region5
  $region4: #{gcn_forward.1} parent=0 // pred_region
    _
  $region5: #{gcn_forward.1} parent=0 // pred_fallthru
    _
  // Predicated region
  $region6: #{gcn_forward.1} parent=0 // pred_check
    _
  $region7: #{gcn_forward.1} parent=0 // pred_check_branch
    %14 = sbr.rel (0) target = $region9
  $region8: #{gcn_forward.1} parent=0 // pred_region
    _
  $region9: #{gcn_forward.1} parent=0 // pred_fallthru
    _
  // Predicated region
  $region10: #{gcn_forward.1} parent=0 // pred_check
    _
  $region11: #{gcn_forward.1} parent=0 // pred_check_branch
    %16 = sbr.rel (0) target = $region13
  $region12: #{gcn_forward.1} parent=0 // pred_region
    _
  $region13: #{gcn_forward.1} parent=0 // pred_fallthru
    _
  // Predicated region
  $region14: #{gcn_forward.1} parent=0 // pred_check
    _
  $region15: #{gcn_forward.1} parent=0 // pred_check_branch
    %18 = sbr.rel (0) target = $region17
  $region16: #{gcn_forward.1} parent=0 // pred_region
    _
  $region17: #{gcn_forward.1} parent=0 // pred_fallthru
    _
  // Predicated region
  $region18: #{gcn_forward.1} parent=0 // pred_check
    _
  $region19: #{gcn_forward.1} parent=0 // pred_check_branch
    %20 = sbr.rel (0) target = $region21
  $region20: #{gcn_forward.1} parent=0 // pred_region
    _
  $region21: #{gcn_forward.1} parent=0 // pred_fallthru
    _
  // Predicated region
  $region22: #{gcn_forward.1} parent=0 // pred_check
    _
  $region23: #{gcn_forward.1} parent=0 // pred_check_branch
    %22 = sbr.rel (0) target = $region25
  $region24: #{gcn_forward.1} parent=0 // pred_region
    _
  $region25: #{gcn_forward.1} parent=0 // pred_fallthru
    _
  %v23 = vld [vmem:[%s5] sm:$0xff]
  %v24 = vld [vmem:[%s5 + $0x8] sm:$0xff]
  %v25 = vld [vmem:[%s5 + $0x10] sm:$0xff]
  %v26 = vld [vmem:[%s5 + $0x18] sm:$0xff]
  %v27 = vld [vmem:[%s5 + $0x20] sm:$0xff]
  %v28 = vld [vmem:[%s5 + $0x28] sm:$0xff]
  %v29 = vld [vmem:[%s5 + $0x30] sm:$0xff]
  %v30 = vld [vmem:[%s5 + $0x38] sm:$0xff]
  %v31 = vld [vmem:[%s5 + $0x40] sm:$0xff]
  %v32 = vld [vmem:[%s5 + $0x48] sm:$0xff]
  %v33 = vld [vmem:[%s5 + $0x50] sm:$0xff]
  %v34 = vld [vmem:[%s5 + $0x58] sm:$0xff]
  %v35 = vld [vmem:[%s5 + $0x60] sm:$0xff]
  %v36 = vld [vmem:[%s5 + $0x68] sm:$0xff]
  %v37 = vld [vmem:[%s5 + $0x70] sm:$0xff]
  %v38 = vld [vmem:[%s5 + $0x78] sm:$0xff]
  %v39 = vld [vmem:[%s0] sm:$0xff]
  %v40 = vld [vmem:[%s0 + $0x8] sm:$0xff]
  %v41 = vld [vmem:[%s0 + $0x10] sm:$0xff]
  %v42 = vld [vmem:[%s0 + $0x18] sm:$0xff]
  %v43 = vld [vmem:[%s0 + $0x20] sm:$0xff]
  %v44 = vld [vmem:[%s0 + $0x28] sm:$0xff]
  %v45 = vld [vmem:[%s0 + $0x30] sm:$0xff]
  %v46 = vld [vmem:[%s0 + $0x38] sm:$0xff]
  %v47 = vld [vmem:[%s0 + $0x40] sm:$0xff]
  %v48 = vld [vmem:[%s0 + $0x48] sm:$0xff]
  %v49 = vld [vmem:[%s0 + $0x50] sm:$0xff]
  %v50 = vld [vmem:[%s0 + $0x58] sm:$0xff]
  %v51 = vld [vmem:[%s0 + $0x60] sm:$0xff]
  %v52 = vld [vmem:[%s0 + $0x68] sm:$0xff]
  %v53 = vld [vmem:[%s0 + $0x70] sm:$0xff]
  %v54 = vld [vmem:[%s0 + $0x78] sm:$0xff]
  %v55 = vld [vmem:[%s1] sm:$0xff]
  %v56 = vld [vmem:[%s1 + $0x8] sm:$0xff]
  %vm57 = vcmask 130048
  %v59 = vsel %vm57, %v39, 0
  %v62 = vsel %vm57, %v40, 0
  %v65 = vsel %vm57, %v41, 0
  %v68 = vsel %vm57, %v42, 0
  %v71 = vsel %vm57, %v43, 0
  %v74 = vsel %vm57, %v44, 0
  %v77 = vsel %vm57, %v45, 0
  %v80 = vsel %vm57, %v46, 0
  %v83 = vsel %vm57, %v47, 0
  %v86 = vsel %vm57, %v48, 0
  %v89 = vsel %vm57, %v49, 0
  %v92 = vsel %vm57, %v50, 0
  %v95 = vsel %vm57, %v51, 0
  %v98 = vsel %vm57, %v52, 0
  %v101 = vsel %vm57, %v53, 0
  %v104 = vsel %vm57, %v54, 0
  %106 = vmatprep.subr.mxu0 0.0
  %107 = vmatpush1.msra.mxu0 %v55
  %108 = vmatprep.subr.mxu0 0.0
  %109 = vmatpush1.msra.mxu0 %v56
  %110 = vmatprep.subr.mxu0 0.0
  %111 = vmatpush1.msra.mxu0 0.0
  %112 = vmatprep.subr.mxu0 0.0
  %113 = vmatpush1.msra.mxu0 0.0
  %114 = vmatprep.subr.mxu0 0.0
  %115 = vmatpush1.msra.mxu0 0.0
  %116 = vmatprep.subr.mxu0 0.0
  %117 = vmatpush1.msra.mxu0 0.0
  %118 = vmatprep.subr.mxu0 0.0
  %119 = vmatpush1.msra.mxu0 0.0
  %120 = vmatprep.subr.mxu0 0.0
  %121 = vmatpush1.msra.mxu0 0.0
  %122 = vmatprep.subr.mxu0 0.0
  %123 = vmatpush1.msra.mxu0 0.0
  %124 = vmatprep.subr.mxu0 0.0
  %125 = vmatpush1.msra.mxu0 0.0
  %126 = vmatprep.subr.mxu0 0.0
  %127 = vmatpush1.msra.mxu0 0.0
  %128 = vmatprep.subr.mxu0 0.0
  %129 = vmatpush1.msra.mxu0 0.0
  %130 = vmatprep.subr.mxu0 0.0
  %131 = vmatpush1.msra.mxu0 0.0
  %132 = vmatprep.subr.mxu0 0.0
  %133 = vmatpush1.msra.mxu0 0.0
  %134 = vmatprep.subr.mxu0 0.0
  %135 = vmatpush1.msra.mxu0 0.0
  %136 = vmatprep.subr.mxu0 0.0
  %137 = vmatpush1.msra.mxu0 0.0
  %138 = vmatprep.subr.mxu0 0.0
  %139 = vmatpush1.msra.mxu0 0.0
  %140 = vmatprep.subr.mxu0 0.0
  %141 = vmatpush1.msra.mxu0 0.0
  %142 = vmatprep.subr.mxu0 0.0
  %143 = vmatpush1.msra.mxu0 0.0
  %144 = vmatprep.subr.mxu0 0.0
  %145 = vmatpush1.msra.mxu0 0.0
  %146 = vmatprep.subr.mxu0 0.0
  %147 = vmatpush1.msra.mxu0 0.0
  %148 = vmatprep.subr.mxu0 0.0
  %149 = vmatpush1.msra.mxu0 0.0
  %150 = vmatprep.subr.mxu0 0.0
  %151 = vmatpush1.msra.mxu0 0.0
  %152 = vmatprep.subr.mxu0 0.0
  %153 = vmatpush1.msra.mxu0 0.0
  %154 = vmatprep.subr.mxu0 0.0
  %155 = vmatpush1.msra.mxu0 0.0
  %156 = vmatprep.subr.mxu0 0.0
  %157 = vmatpush1.msra.mxu0 0.0
  %158 = vmatprep.subr.mxu0 0.0
  %159 = vmatpush1.msra.mxu0 0.0
  %160 = vmatprep.subr.mxu0 0.0
  %161 = vmatpush1.msra.mxu0 0.0
  %162 = vmatprep.subr.mxu0 0.0
  %163 = vmatpush1.msra.mxu0 0.0
  %164 = vmatprep.subr.mxu0 0.0
  %165 = vmatpush1.msra.mxu0 0.0
  %166 = vmatprep.subr.mxu0 0.0
  %167 = vmatpush1.msra.mxu0 0.0
  %168 = vmatprep.subr.mxu0 0.0
  %169 = vmatpush1.msra.mxu0 0.0
  %170 = vmatprep.mubr.f32.mxu0 0.0
  %171 = vmatmul.mubr.f32.gmra.mrb[0].mxu0 %v59
  %v172 = vpop.f32.mrb[0].mxu0
  %v173 = vadd.f32 0.0, %v172
  %v174 = vpop.f32.mrb[0].mxu0
  %175 = vmatprep.mubr.f32.mxu0 0.0
  %176 = vmatmul.mubr.f32.gmra.mrb[0].mxu0 %v62
  %v177 = vpop.f32.mrb[0].mxu0
  %v178 = vadd.f32 0.0, %v177
  %v179 = vpop.f32.mrb[0].mxu0
  %180 = vmatprep.mubr.f32.mxu0 0.0
  %181 = vmatmul.mubr.f32.gmra.mrb[0].mxu0 %v65
  %v182 = vpop.f32.mrb[0].mxu0
  %v183 = vadd.f32 0.0, %v182
  %v184 = vpop.f32.mrb[0].mxu0
  %185 = vmatprep.mubr.f32.mxu0 0.0
  %186 = vmatmul.mubr.f32.gmra.mrb[0].mxu0 %v68
  %v187 = vpop.f32.mrb[0].mxu0
  %v188 = vadd.f32 0.0, %v187
  %v189 = vpop.f32.mrb[0].mxu0
  %190 = vmatprep.mubr.f32.mxu0 0.0
  %191 = vmatmul.mubr.f32.gmra.mrb[0].mxu0 %v71
  %v192 = vpop.f32.mrb[0].mxu0
  %v193 = vadd.f32 0.0, %v192
  %v194 = vpop.f32.mrb[0].mxu0
  %195 = vmatprep.mubr.f32.mxu0 0.0
  %196 = vmatmul.mubr.f32.gmra.mrb[0].mxu0 %v74
  %v197 = vpop.f32.mrb[0].mxu0
  %v198 = vadd.f32 0.0, %v197
  %v199 = vpop.f32.mrb[0].mxu0
  %200 = vmatprep.mubr.f32.mxu0 0.0
  %201 = vmatmul.mubr.f32.gmra.mrb[0].mxu0 %v77
  %v202 = vpop.f32.mrb[0].mxu0
  %v203 = vadd.f32 0.0, %v202
  %v204 = vpop.f32.mrb[0].mxu0
  %205 = vmatprep.mubr.f32.mxu0 0.0
  %206 = vmatmul.mubr.f32.gmra.mrb[0].mxu0 %v80
  %v207 = vpop.f32.mrb[0].mxu0
  %v208 = vadd.f32 0.0, %v207
  %v209 = vpop.f32.mrb[0].mxu0
  %210 = vmatprep.mubr.f32.mxu0 0.0
  %211 = vmatmul.mubr.f32.gmra.mrb[0].mxu0 %v83
  %v212 = vpop.f32.mrb[0].mxu0
  %v213 = vadd.f32 0.0, %v212
  %v214 = vpop.f32.mrb[0].mxu0
  %215 = vmatprep.mubr.f32.mxu0 0.0
  %216 = vmatmul.mubr.f32.gmra.mrb[0].mxu0 %v86
  %v217 = vpop.f32.mrb[0].mxu0
  %v218 = vadd.f32 0.0, %v217
  %v219 = vpop.f32.mrb[0].mxu0
  %220 = vmatprep.mubr.f32.mxu0 0.0
  %221 = vmatmul.mubr.f32.gmra.mrb[0].mxu0 %v89
  %v222 = vpop.f32.mrb[0].mxu0
  %v223 = vadd.f32 0.0, %v222
  %v224 = vpop.f32.mrb[0].mxu0
  %225 = vmatprep.mubr.f32.mxu0 0.0
  %226 = vmatmul.mubr.f32.gmra.mrb[0].mxu0 %v92
  %v227 = vpop.f32.mrb[0].mxu0
  %v228 = vadd.f32 0.0, %v227
  %v229 = vpop.f32.mrb[0].mxu0
  %230 = vmatprep.mubr.f32.mxu0 0.0
  %231 = vmatmul.mubr.f32.gmra.mrb[0].mxu0 %v95
  %v232 = vpop.f32.mrb[0].mxu0
  %v233 = vadd.f32 0.0, %v232
  %v234 = vpop.f32.mrb[0].mxu0
  %235 = vmatprep.mubr.f32.mxu0 0.0
  %236 = vmatmul.mubr.f32.gmra.mrb[0].mxu0 %v98
  %v237 = vpop.f32.mrb[0].mxu0
  %v238 = vadd.f32 0.0, %v237
  %v239 = vpop.f32.mrb[0].mxu0
  %240 = vmatprep.mubr.f32.mxu0 0.0
  %241 = vmatmul.mubr.f32.gmra.mrb[0].mxu0 %v101
  %v242 = vpop.f32.mrb[0].mxu0
  %v243 = vadd.f32 0.0, %v242
  %v244 = vpop.f32.mrb[0].mxu0
  %245 = vmatprep.mubr.f32.mxu0 0.0
  %246 = vmatmul.mubr.f32.gmra.mrb[0].mxu0 %v104
  %v247 = vpop.f32.mrb[0].mxu0
  %v248 = vadd.f32 0.0, %v247
  %v249 = vpop.f32.mrb[0].mxu0
  %250 = vdwg.mxu0
  %v251 = vld [vmem:[%s2] sm:$0x1]
  %v253 = vlaneseq
  %v254 = vshrl.u32 %v253, 7
  %v255 = vsub.s32 0, %v254
  %v256 = vrot.slane %v251, %v255
  %258 = vmatprep.subr.mxu0 0.0
  %259 = vmatpush1.msra.mxu0 %v173
  %260 = vmatprep.subr.mxu0 0.0
  %261 = vmatpush1.msra.mxu0 %v178
  %262 = vmatprep.subr.mxu0 0.0
  %263 = vmatpush1.msra.mxu0 %v183
  %264 = vmatprep.subr.mxu0 0.0
  %265 = vmatpush1.msra.mxu0 %v188
  %266 = vmatprep.subr.mxu0 0.0
  %267 = vmatpush1.msra.mxu0 %v193
  %268 = vmatprep.subr.mxu0 0.0
  %269 = vmatpush1.msra.mxu0 %v198
  %270 = vmatprep.subr.mxu0 0.0
  %271 = vmatpush1.msra.mxu0 %v203
  %272 = vmatprep.subr.mxu0 0.0
  %273 = vmatpush1.msra.mxu0 %v208
  %274 = vmatprep.subr.mxu0 0.0
  %275 = vmatpush1.msra.mxu0 %v213
  %276 = vmatprep.subr.mxu0 0.0
  %277 = vmatpush1.msra.mxu0 %v218
  %278 = vmatprep.subr.mxu0 0.0
  %279 = vmatpush1.msra.mxu0 %v223
  %280 = vmatprep.subr.mxu0 0.0
  %281 = vmatpush1.msra.mxu0 %v228
  %282 = vmatprep.subr.mxu0 0.0
  %283 = vmatpush1.msra.mxu0 %v233
  %284 = vmatprep.subr.mxu0 0.0
  %285 = vmatpush1.msra.mxu0 %v238
  %286 = vmatprep.subr.mxu0 0.0
  %287 = vmatpush1.msra.mxu0 %v243
  %288 = vmatprep.subr.mxu0 0.0
  %289 = vmatpush1.msra.mxu0 %v248
  %290 = vmatprep.subr.mxu0 0.0
  %291 = vmatpush1.msra.mxu0 0.0
  %292 = vmatprep.subr.mxu0 0.0
  %293 = vmatpush1.msra.mxu0 0.0
  %294 = vmatprep.subr.mxu0 0.0
  %295 = vmatpush1.msra.mxu0 0.0
  %296 = vmatprep.subr.mxu0 0.0
  %297 = vmatpush1.msra.mxu0 0.0
  %298 = vmatprep.subr.mxu0 0.0
  %299 = vmatpush1.msra.mxu0 0.0
  %300 = vmatprep.subr.mxu0 0.0
  %301 = vmatpush1.msra.mxu0 0.0
  %302 = vmatprep.subr.mxu0 0.0
  %303 = vmatpush1.msra.mxu0 0.0
  %304 = vmatprep.subr.mxu0 0.0
  %305 = vmatpush1.msra.mxu0 0.0
  %306 = vmatprep.subr.mxu0 0.0
  %307 = vmatpush1.msra.mxu0 0.0
  %308 = vmatprep.subr.mxu0 0.0
  %309 = vmatpush1.msra.mxu0 0.0
  %310 = vmatprep.subr.mxu0 0.0
  %311 = vmatpush1.msra.mxu0 0.0
  %312 = vmatprep.subr.mxu0 0.0
  %313 = vmatpush1.msra.mxu0 0.0
  %314 = vmatprep.subr.mxu0 0.0
  %315 = vmatpush1.msra.mxu0 0.0
  %316 = vmatprep.subr.mxu0 0.0
  %317 = vmatpush1.msra.mxu0 0.0
  %318 = vmatprep.subr.mxu0 0.0
  %319 = vmatpush1.msra.mxu0 0.0
  %320 = vmatprep.subr.mxu0 0.0
  %321 = vmatpush1.msra.mxu0 0.0
  %322 = vmatprep.mubr.f32.mxu0 0.0
  %323 = vmatmul.mubr.f32.gmra.mrb[0].mxu0 %v23
  %v324 = vpop.f32.mrb[0].mxu0
  %v325 = vadd.f32 %v256, %v324
  %v326 = vpop.f32.mrb[0].mxu0
  %327 = vmatprep.mubr.f32.mxu0 0.0
  %328 = vmatmul.mubr.f32.gmra.mrb[0].mxu0 %v24
  %v329 = vpop.f32.mrb[0].mxu0
  %v330 = vadd.f32 %v256, %v329
  %v331 = vpop.f32.mrb[0].mxu0
  %332 = vmatprep.mubr.f32.mxu0 0.0
  %333 = vmatmul.mubr.f32.gmra.mrb[0].mxu0 %v25
  %v334 = vpop.f32.mrb[0].mxu0
  %v335 = vadd.f32 %v256, %v334
  %v336 = vpop.f32.mrb[0].mxu0
  %337 = vmatprep.mubr.f32.mxu0 0.0
  %338 = vmatmul.mubr.f32.gmra.mrb[0].mxu0 %v26
  %v339 = vpop.f32.mrb[0].mxu0
  %v340 = vadd.f32 %v256, %v339
  %v341 = vpop.f32.mrb[0].mxu0
  %342 = vmatprep.mubr.f32.mxu0 0.0
  %343 = vmatmul.mubr.f32.gmra.mrb[0].mxu0 %v27
  %v344 = vpop.f32.mrb[0].mxu0
  %v345 = vadd.f32 %v256, %v344
  %v346 = vpop.f32.mrb[0].mxu0
  %347 = vmatprep.mubr.f32.mxu0 0.0
  %348 = vmatmul.mubr.f32.gmra.mrb[0].mxu0 %v28
  %v349 = vpop.f32.mrb[0].mxu0
  %v350 = vadd.f32 %v256, %v349
  %v351 = vpop.f32.mrb[0].mxu0
  %352 = vmatprep.mubr.f32.mxu0 0.0
  %353 = vmatmul.mubr.f32.gmra.mrb[0].mxu0 %v29
  %v354 = vpop.f32.mrb[0].mxu0
  %v355 = vadd.f32 %v256, %v354
  %v356 = vpop.f32.mrb[0].mxu0
  %357 = vmatprep.mubr.f32.mxu0 0.0
  %358 = vmatmul.mubr.f32.gmra.mrb[0].mxu0 %v30
  %v359 = vpop.f32.mrb[0].mxu0
  %v360 = vadd.f32 %v256, %v359
  %v361 = vpop.f32.mrb[0].mxu0
  %362 = vmatprep.mubr.f32.mxu0 0.0
  %363 = vmatmul.mubr.f32.gmra.mrb[0].mxu0 %v31
  %v364 = vpop.f32.mrb[0].mxu0
  %v365 = vadd.f32 %v256, %v364
  %v366 = vpop.f32.mrb[0].mxu0
  %367 = vmatprep.mubr.f32.mxu0 0.0
  %368 = vmatmul.mubr.f32.gmra.mrb[0].mxu0 %v32
  %v369 = vpop.f32.mrb[0].mxu0
  %v370 = vadd.f32 %v256, %v369
  %v371 = vpop.f32.mrb[0].mxu0
  %372 = vmatprep.mubr.f32.mxu0 0.0
  %373 = vmatmul.mubr.f32.gmra.mrb[0].mxu0 %v33
  %v374 = vpop.f32.mrb[0].mxu0
  %v375 = vadd.f32 %v256, %v374
  %v376 = vpop.f32.mrb[0].mxu0
  %377 = vmatprep.mubr.f32.mxu0 0.0
  %378 = vmatmul.mubr.f32.gmra.mrb[0].mxu0 %v34
  %v379 = vpop.f32.mrb[0].mxu0
  %v380 = vadd.f32 %v256, %v379
  %v381 = vpop.f32.mrb[0].mxu0
  %382 = vmatprep.mubr.f32.mxu0 0.0
  %383 = vmatmul.mubr.f32.gmra.mrb[0].mxu0 %v35
  %v384 = vpop.f32.mrb[0].mxu0
  %v385 = vadd.f32 %v256, %v384
  %v386 = vpop.f32.mrb[0].mxu0
  %387 = vmatprep.mubr.f32.mxu0 0.0
  %388 = vmatmul.mubr.f32.gmra.mrb[0].mxu0 %v36
  %v389 = vpop.f32.mrb[0].mxu0
  %v390 = vadd.f32 %v256, %v389
  %v391 = vpop.f32.mrb[0].mxu0
  %392 = vmatprep.mubr.f32.mxu0 0.0
  %393 = vmatmul.mubr.f32.gmra.mrb[0].mxu0 %v37
  %v394 = vpop.f32.mrb[0].mxu0
  %v395 = vadd.f32 %v256, %v394
  %v396 = vpop.f32.mrb[0].mxu0
  %397 = vmatprep.mubr.f32.mxu0 0.0
  %398 = vmatmul.mubr.f32.gmra.mrb[0].mxu0 %v38
  %v399 = vpop.f32.mrb[0].mxu0
  %v400 = vadd.f32 %v256, %v399
  %v401 = vpop.f32.mrb[0].mxu0
  %402 = vdwg.mxu0
  %v403 = vld [vmem:[%s3] sm:$0xff]
  %v404 = vld [vmem:[%s3 + $0x8] sm:$0xff]
  %v405 = vld [vmem:[%s3 + $0x10] sm:$0xff]
  %v406 = vld [vmem:[%s3 + $0x18] sm:$0xff]
  %v407 = vld [vmem:[%s3 + $0x20] sm:$0xff]
  %v408 = vld [vmem:[%s3 + $0x28] sm:$0xff]
  %v409 = vld [vmem:[%s3 + $0x30] sm:$0xff]
  %v410 = vld [vmem:[%s3 + $0x38] sm:$0xff]
  %v411 = vld [vmem:[%s3 + $0x40] sm:$0xff]
  %v412 = vld [vmem:[%s3 + $0x48] sm:$0xff]
  %v413 = vld [vmem:[%s3 + $0x50] sm:$0xff]
  %v414 = vld [vmem:[%s3 + $0x58] sm:$0xff]
  %v415 = vld [vmem:[%s3 + $0x60] sm:$0xff]
  %v416 = vld [vmem:[%s3 + $0x68] sm:$0xff]
  %v417 = vld [vmem:[%s3 + $0x70] sm:$0xff]
  %v418 = vld [vmem:[%s3 + $0x78] sm:$0xff]
  %419 = vmatprep.subr.mxu0 0.0
  %420 = vmatpush1.msra.mxu0 %v403
  %421 = vmatprep.subr.mxu0 0.0
  %422 = vmatpush1.msra.mxu0 %v404
  %423 = vmatprep.subr.mxu0 0.0
  %424 = vmatpush1.msra.mxu0 %v405
  %425 = vmatprep.subr.mxu0 0.0
  %426 = vmatpush1.msra.mxu0 %v406
  %427 = vmatprep.subr.mxu0 0.0
  %428 = vmatpush1.msra.mxu0 %v407
  %429 = vmatprep.subr.mxu0 0.0
  %430 = vmatpush1.msra.mxu0 %v408
  %431 = vmatprep.subr.mxu0 0.0
  %432 = vmatpush1.msra.mxu0 %v409
  %433 = vmatprep.subr.mxu0 0.0
  %434 = vmatpush1.msra.mxu0 %v410
  %435 = vmatprep.subr.mxu0 0.0
  %436 = vmatpush1.msra.mxu0 %v411
  %437 = vmatprep.subr.mxu0 0.0
  %438 = vmatpush1.msra.mxu0 %v412
  %439 = vmatprep.subr.mxu0 0.0
  %440 = vmatpush1.msra.mxu0 %v413
  %441 = vmatprep.subr.mxu0 0.0
  %442 = vmatpush1.msra.mxu0 %v414
  %443 = vmatprep.subr.mxu0 0.0
  %444 = vmatpush1.msra.mxu0 %v415
  %445 = vmatprep.subr.mxu0 0.0
  %446 = vmatpush1.msra.mxu0 %v416
  %447 = vmatprep.subr.mxu0 0.0
  %448 = vmatpush1.msra.mxu0 %v417
  %449 = vmatprep.subr.mxu0 0.0
  %450 = vmatpush1.msra.mxu0 %v418
  %451 = vmatprep.subr.mxu0 0.0
  %452 = vmatpush1.msra.mxu0 0.0
  %453 = vmatprep.subr.mxu0 0.0
  %454 = vmatpush1.msra.mxu0 0.0
  %455 = vmatprep.subr.mxu0 0.0
  %456 = vmatpush1.msra.mxu0 0.0
  %457 = vmatprep.subr.mxu0 0.0
  %458 = vmatpush1.msra.mxu0 0.0
  %459 = vmatprep.subr.mxu0 0.0
  %460 = vmatpush1.msra.mxu0 0.0
  %461 = vmatprep.subr.mxu0 0.0
  %462 = vmatpush1.msra.mxu0 0.0
  %463 = vmatprep.subr.mxu0 0.0
  %464 = vmatpush1.msra.mxu0 0.0
  %465 = vmatprep.subr.mxu0 0.0
  %466 = vmatpush1.msra.mxu0 0.0
  %467 = vmatprep.subr.mxu0 0.0
  %468 = vmatpush1.msra.mxu0 0.0
  %469 = vmatprep.subr.mxu0 0.0
  %470 = vmatpush1.msra.mxu0 0.0
  %471 = vmatprep.subr.mxu0 0.0
  %472 = vmatpush1.msra.mxu0 0.0
  %473 = vmatprep.subr.mxu0 0.0
  %474 = vmatpush1.msra.mxu0 0.0
  %475 = vmatprep.subr.mxu0 0.0
  %476 = vmatpush1.msra.mxu0 0.0
  %477 = vmatprep.subr.mxu0 0.0
  %478 = vmatpush1.msra.mxu0 0.0
  %479 = vmatprep.subr.mxu0 0.0
  %480 = vmatpush1.msra.mxu0 0.0
  %481 = vmatprep.subr.mxu0 0.0
  %482 = vmatpush1.msra.mxu0 0.0
  %483 = vmatprep.mubr.f32.mxu0 0.0
  %484 = vmatmul.mubr.f32.gmra.mrb[0].mxu0 %v325
  %v485 = vpop.f32.mrb[0].mxu0
  %v486 = vadd.f32 0.0, %v485
  %v487 = vpop.f32.mrb[0].mxu0
  %488 = vmatprep.mubr.f32.mxu0 0.0
  %489 = vmatmul.mubr.f32.gmra.mrb[0].mxu0 %v330
  %v490 = vpop.f32.mrb[0].mxu0
  %v491 = vadd.f32 0.0, %v490
  %v492 = vpop.f32.mrb[0].mxu0
  %493 = vmatprep.mubr.f32.mxu0 0.0
  %494 = vmatmul.mubr.f32.gmra.mrb[0].mxu0 %v335
  %v495 = vpop.f32.mrb[0].mxu0
  %v496 = vadd.f32 0.0, %v495
  %v497 = vpop.f32.mrb[0].mxu0
  %498 = vmatprep.mubr.f32.mxu0 0.0
  %499 = vmatmul.mubr.f32.gmra.mrb[0].mxu0 %v340
  %v500 = vpop.f32.mrb[0].mxu0
  %v501 = vadd.f32 0.0, %v500
  %v502 = vpop.f32.mrb[0].mxu0
  %503 = vmatprep.mubr.f32.mxu0 0.0
  %504 = vmatmul.mubr.f32.gmra.mrb[0].mxu0 %v345
  %v505 = vpop.f32.mrb[0].mxu0
  %v506 = vadd.f32 0.0, %v505
  %v507 = vpop.f32.mrb[0].mxu0
  %508 = vmatprep.mubr.f32.mxu0 0.0
  %509 = vmatmul.mubr.f32.gmra.mrb[0].mxu0 %v350
  %v510 = vpop.f32.mrb[0].mxu0
  %v511 = vadd.f32 0.0, %v510
  %v512 = vpop.f32.mrb[0].mxu0
  %513 = vmatprep.mubr.f32.mxu0 0.0
  %514 = vmatmul.mubr.f32.gmra.mrb[0].mxu0 %v355
  %v515 = vpop.f32.mrb[0].mxu0
  %v516 = vadd.f32 0.0, %v515
  %v517 = vpop.f32.mrb[0].mxu0
  %518 = vmatprep.mubr.f32.mxu0 0.0
  %519 = vmatmul.mubr.f32.gmra.mrb[0].mxu0 %v360
  %v520 = vpop.f32.mrb[0].mxu0
  %v521 = vadd.f32 0.0, %v520
  %v522 = vpop.f32.mrb[0].mxu0
  %523 = vmatprep.mubr.f32.mxu0 0.0
  %524 = vmatmul.mubr.f32.gmra.mrb[0].mxu0 %v365
  %v525 = vpop.f32.mrb[0].mxu0
  %v526 = vadd.f32 0.0, %v525
  %v527 = vpop.f32.mrb[0].mxu0
  %528 = vmatprep.mubr.f32.mxu0 0.0
  %529 = vmatmul.mubr.f32.gmra.mrb[0].mxu0 %v370
  %v530 = vpop.f32.mrb[0].mxu0
  %v531 = vadd.f32 0.0, %v530
  %v532 = vpop.f32.mrb[0].mxu0
  %533 = vmatprep.mubr.f32.mxu0 0.0
  %534 = vmatmul.mubr.f32.gmra.mrb[0].mxu0 %v375
  %v535 = vpop.f32.mrb[0].mxu0
  %v536 = vadd.f32 0.0, %v535
  %v537 = vpop.f32.mrb[0].mxu0
  %538 = vmatprep.mubr.f32.mxu0 0.0
  %539 = vmatmul.mubr.f32.gmra.mrb[0].mxu0 %v380
  %v540 = vpop.f32.mrb[0].mxu0
  %v541 = vadd.f32 0.0, %v540
  %v542 = vpop.f32.mrb[0].mxu0
  %543 = vmatprep.mubr.f32.mxu0 0.0
  %544 = vmatmul.mubr.f32.gmra.mrb[0].mxu0 %v385
  %v545 = vpop.f32.mrb[0].mxu0
  %v546 = vadd.f32 0.0, %v545
  %v547 = vpop.f32.mrb[0].mxu0
  %548 = vmatprep.mubr.f32.mxu0 0.0
  %549 = vmatmul.mubr.f32.gmra.mrb[0].mxu0 %v390
  %v550 = vpop.f32.mrb[0].mxu0
  %v551 = vadd.f32 0.0, %v550
  %v552 = vpop.f32.mrb[0].mxu0
  %553 = vmatprep.mubr.f32.mxu0 0.0
  %554 = vmatmul.mubr.f32.gmra.mrb[0].mxu0 %v395
  %v555 = vpop.f32.mrb[0].mxu0
  %v556 = vadd.f32 0.0, %v555
  %v557 = vpop.f32.mrb[0].mxu0
  %558 = vmatprep.mubr.f32.mxu0 0.0
  %559 = vmatmul.mubr.f32.gmra.mrb[0].mxu0 %v400
  %v560 = vpop.f32.mrb[0].mxu0
  %v561 = vadd.f32 0.0, %v560
  %v562 = vpop.f32.mrb[0].mxu0
  %563 = vdwg.mxu0
  %v564 = vld [vmem:[%s4] sm:$0x1]
  %v566 = vlaneseq
  %v567 = vshrl.u32 %v566, 7
  %v568 = vsub.s32 0, %v567
  %v569 = vrot.slane %v564, %v568
  %571 = vmatprep.subr.mxu0 0.0
  %572 = vmatpush1.msra.mxu0 %v486
  %573 = vmatprep.subr.mxu0 0.0
  %574 = vmatpush1.msra.mxu0 %v491
  %575 = vmatprep.subr.mxu0 0.0
  %576 = vmatpush1.msra.mxu0 %v496
  %577 = vmatprep.subr.mxu0 0.0
  %578 = vmatpush1.msra.mxu0 %v501
  %579 = vmatprep.subr.mxu0 0.0
  %580 = vmatpush1.msra.mxu0 %v506
  %581 = vmatprep.subr.mxu0 0.0
  %582 = vmatpush1.msra.mxu0 %v511
  %583 = vmatprep.subr.mxu0 0.0
  %584 = vmatpush1.msra.mxu0 %v516
  %585 = vmatprep.subr.mxu0 0.0
  %586 = vmatpush1.msra.mxu0 %v521
  %587 = vmatprep.subr.mxu0 0.0
  %588 = vmatpush1.msra.mxu0 %v526
  %589 = vmatprep.subr.mxu0 0.0
  %590 = vmatpush1.msra.mxu0 %v531
  %591 = vmatprep.subr.mxu0 0.0
  %592 = vmatpush1.msra.mxu0 %v536
  %593 = vmatprep.subr.mxu0 0.0
  %594 = vmatpush1.msra.mxu0 %v541
  %595 = vmatprep.subr.mxu0 0.0
  %596 = vmatpush1.msra.mxu0 %v546
  %597 = vmatprep.subr.mxu0 0.0
  %598 = vmatpush1.msra.mxu0 %v551
  %599 = vmatprep.subr.mxu0 0.0
  %600 = vmatpush1.msra.mxu0 %v556
  %601 = vmatprep.subr.mxu0 0.0
  %602 = vmatpush1.msra.mxu0 %v561
  %603 = vmatprep.subr.mxu0 0.0
  %604 = vmatpush1.msra.mxu0 0.0
  %605 = vmatprep.subr.mxu0 0.0
  %606 = vmatpush1.msra.mxu0 0.0
  %607 = vmatprep.subr.mxu0 0.0
  %608 = vmatpush1.msra.mxu0 0.0
  %609 = vmatprep.subr.mxu0 0.0
  %610 = vmatpush1.msra.mxu0 0.0
  %611 = vmatprep.subr.mxu0 0.0
  %612 = vmatpush1.msra.mxu0 0.0
  %613 = vmatprep.subr.mxu0 0.0
  %614 = vmatpush1.msra.mxu0 0.0
  %615 = vmatprep.subr.mxu0 0.0
  %616 = vmatpush1.msra.mxu0 0.0
  %617 = vmatprep.subr.mxu0 0.0
  %618 = vmatpush1.msra.mxu0 0.0
  %619 = vmatprep.subr.mxu0 0.0
  %620 = vmatpush1.msra.mxu0 0.0
  %621 = vmatprep.subr.mxu0 0.0
  %622 = vmatpush1.msra.mxu0 0.0
  %623 = vmatprep.subr.mxu0 0.0
  %624 = vmatpush1.msra.mxu0 0.0
  %625 = vmatprep.subr.mxu0 0.0
  %626 = vmatpush1.msra.mxu0 0.0
  %627 = vmatprep.subr.mxu0 0.0
  %628 = vmatpush1.msra.mxu0 0.0
  %629 = vmatprep.subr.mxu0 0.0
  %630 = vmatpush1.msra.mxu0 0.0
  %631 = vmatprep.subr.mxu0 0.0
  %632 = vmatpush1.msra.mxu0 0.0
  %633 = vmatprep.subr.mxu0 0.0
  %634 = vmatpush1.msra.mxu0 0.0
  %635 = vmatprep.mubr.f32.mxu0 0.0
  %636 = vmatmul.mubr.f32.gmra.mrb[0].mxu0 %v23
  %v637 = vpop.f32.mrb[0].mxu0
  %v638 = vadd.f32 %v569, %v637
  %v639 = vpop.f32.mrb[0].mxu0
  %640 = vmatprep.mubr.f32.mxu0 0.0
  %641 = vmatmul.mubr.f32.gmra.mrb[0].mxu0 %v24
  %v642 = vpop.f32.mrb[0].mxu0
  %v643 = vadd.f32 %v569, %v642
  %v644 = vpop.f32.mrb[0].mxu0
  %645 = vmatprep.mubr.f32.mxu0 0.0
  %646 = vmatmul.mubr.f32.gmra.mrb[0].mxu0 %v25
  %v647 = vpop.f32.mrb[0].mxu0
  %v648 = vadd.f32 %v569, %v647
  %v649 = vpop.f32.mrb[0].mxu0
  %650 = vmatprep.mubr.f32.mxu0 0.0
  %651 = vmatmul.mubr.f32.gmra.mrb[0].mxu0 %v26
  %v652 = vpop.f32.mrb[0].mxu0
  %v653 = vadd.f32 %v569, %v652
  %v654 = vpop.f32.mrb[0].mxu0
  %655 = vmatprep.mubr.f32.mxu0 0.0
  %656 = vmatmul.mubr.f32.gmra.mrb[0].mxu0 %v27
  %v657 = vpop.f32.mrb[0].mxu0
  %v658 = vadd.f32 %v569, %v657
  %v659 = vpop.f32.mrb[0].mxu0
  %660 = vmatprep.mubr.f32.mxu0 0.0
  %661 = vmatmul.mubr.f32.gmra.mrb[0].mxu0 %v28
  %v662 = vpop.f32.mrb[0].mxu0
  %v663 = vadd.f32 %v569, %v662
  %v664 = vpop.f32.mrb[0].mxu0
  %665 = vmatprep.mubr.f32.mxu0 0.0
  %666 = vmatmul.mubr.f32.gmra.mrb[0].mxu0 %v29
  %v667 = vpop.f32.mrb[0].mxu0
  %v668 = vadd.f32 %v569, %v667
  %v669 = vpop.f32.mrb[0].mxu0
  %670 = vmatprep.mubr.f32.mxu0 0.0
  %671 = vmatmul.mubr.f32.gmra.mrb[0].mxu0 %v30
  %v672 = vpop.f32.mrb[0].mxu0
  %v673 = vadd.f32 %v569, %v672
  %v674 = vpop.f32.mrb[0].mxu0
  %675 = vmatprep.mubr.f32.mxu0 0.0
  %676 = vmatmul.mubr.f32.gmra.mrb[0].mxu0 %v31
  %v677 = vpop.f32.mrb[0].mxu0
  %v678 = vadd.f32 %v569, %v677
  %v679 = vpop.f32.mrb[0].mxu0
  %680 = vmatprep.mubr.f32.mxu0 0.0
  %681 = vmatmul.mubr.f32.gmra.mrb[0].mxu0 %v32
  %v682 = vpop.f32.mrb[0].mxu0
  %v683 = vadd.f32 %v569, %v682
  %v684 = vpop.f32.mrb[0].mxu0
  %685 = vmatprep.mubr.f32.mxu0 0.0
  %686 = vmatmul.mubr.f32.gmra.mrb[0].mxu0 %v33
  %v687 = vpop.f32.mrb[0].mxu0
  %v688 = vadd.f32 %v569, %v687
  %v689 = vpop.f32.mrb[0].mxu0
  %690 = vmatprep.mubr.f32.mxu0 0.0
  %691 = vmatmul.mubr.f32.gmra.mrb[0].mxu0 %v34
  %v692 = vpop.f32.mrb[0].mxu0
  %v693 = vadd.f32 %v569, %v692
  %v694 = vpop.f32.mrb[0].mxu0
  %695 = vmatprep.mubr.f32.mxu0 0.0
  %696 = vmatmul.mubr.f32.gmra.mrb[0].mxu0 %v35
  %v697 = vpop.f32.mrb[0].mxu0
  %v698 = vadd.f32 %v569, %v697
  %v699 = vpop.f32.mrb[0].mxu0
  %700 = vmatprep.mubr.f32.mxu0 0.0
  %701 = vmatmul.mubr.f32.gmra.mrb[0].mxu0 %v36
  %v702 = vpop.f32.mrb[0].mxu0
  %v703 = vadd.f32 %v569, %v702
  %v704 = vpop.f32.mrb[0].mxu0
  %705 = vmatprep.mubr.f32.mxu0 0.0
  %706 = vmatmul.mubr.f32.gmra.mrb[0].mxu0 %v37
  %v707 = vpop.f32.mrb[0].mxu0
  %v708 = vadd.f32 %v569, %v707
  %v709 = vpop.f32.mrb[0].mxu0
  %710 = vmatprep.mubr.f32.mxu0 0.0
  %711 = vmatmul.mubr.f32.gmra.mrb[0].mxu0 %v38
  %v712 = vpop.f32.mrb[0].mxu0
  %v713 = vadd.f32 %v569, %v712
  %v714 = vpop.f32.mrb[0].mxu0
  %715 = vdwg.mxu0
  %716 = vst [vmem:[%s6] sm:$0xff] %v638
  %717 = vst [vmem:[%s6 + $0x8] sm:$0xff] %v643
  %718 = vst [vmem:[%s6 + $0x10] sm:$0xff] %v648
  %719 = vst [vmem:[%s6 + $0x18] sm:$0xff] %v653
  %720 = vst [vmem:[%s6 + $0x20] sm:$0xff] %v658
  %721 = vst [vmem:[%s6 + $0x28] sm:$0xff] %v663
  %722 = vst [vmem:[%s6 + $0x30] sm:$0xff] %v668
  %723 = vst [vmem:[%s6 + $0x38] sm:$0xff] %v673
  %724 = vst [vmem:[%s6 + $0x40] sm:$0xff] %v678
  %725 = vst [vmem:[%s6 + $0x48] sm:$0xff] %v683
  %726 = vst [vmem:[%s6 + $0x50] sm:$0xff] %v688
  %727 = vst [vmem:[%s6 + $0x58] sm:$0xff] %v693
  %728 = vst [vmem:[%s6 + $0x60] sm:$0xff] %v698
  %729 = vst [vmem:[%s6 + $0x68] sm:$0xff] %v703
  %730 = vst [vmem:[%s6 + $0x70] sm:$0xff] %v708
  %731 = vst [vmem:[%s6 + $0x78] sm:$0xff] %v713
  // Predicated region
  $region26: #{gcn_forward.1} parent=0 // pred_check
    _
  $region27: #{gcn_forward.1} parent=0 // pred_check_branch
    %733 = sbr.rel (0) target = $region29
  $region28: #{gcn_forward.1} parent=0 // pred_region
    _
  $region29: #{gcn_forward.1} parent=0 // pred_fallthru
    _
  // Predicated region
  $region30: #{gcn_forward.1} parent=0 // pred_check
    _
  $region31: #{gcn_forward.1} parent=0 // pred_check_branch
    %735 = sbr.rel (0) target = $region33
  $region32: #{gcn_forward.1} parent=0 // pred_region
    _
  $region33: #{gcn_forward.1} parent=0 // pred_fallthru
    _

</llo_original>
